<compile_context>
chip_gen: v7x
topology: tpu7x:2x2x1
jax: 0.10.0
libtpu: 0.0.40
codegen_flags: <defaults>
</compile_context>

<pallas_src>
import functools
import math

import jax
import jax.numpy as jnp
from jax.experimental import pallas as pl
from jax.experimental.pallas import tpu as pltpu


# ---------------------------------------------------------------------------
# helpers
# ---------------------------------------------------------------------------

def _layer_norm(x, gamma, beta, eps=1e-12):
    mu = jnp.mean(x, axis=-1, keepdims=True)
    var = jnp.mean(jnp.square(x - mu), axis=-1, keepdims=True)
    return (x - mu) * jax.lax.rsqrt(var + eps) * gamma + beta


def _vmem_budget_bytes():
    """Generation-aware VMEM budget: ~3/4 of physical, capped at 100 MiB.
    v5e/v6e (128 MiB physical) -> 96 MiB; v7x (64 MiB) -> 48 MiB."""
    cap = 128 << 20
    try:
        cap = int(pltpu.get_tpu_info().vmem_capacity_bytes)
    except Exception:  # hardware-info query only; fall back to 128 MiB parts
        pass
    return int(min(cap * 3 // 4, 100 << 20))


@functools.lru_cache(maxsize=None)
def _single_buffer_supported():
    """Compile-time probe: does this jax build lower pipeline_mode=pl.Buffered(1)?
    The real kernels' execution is never wrapped in a try/except."""
    def probe(x_ref, o_ref):
        o_ref[...] = x_ref[...] * 2.0
    try:
        f = pl.pallas_call(
            probe,
            out_shape=jax.ShapeDtypeStruct((16, 128), jnp.float32),
            grid=(2,),
            in_specs=[pl.BlockSpec((8, 128), lambda i: (0, 0),
                                   pipeline_mode=pl.Buffered(1))],
            out_specs=pl.BlockSpec((8, 128), lambda i: (i, 0)),
        )
        jax.jit(f).lower(jnp.ones((8, 128), jnp.float32)).compile()
        return True
    except Exception:
        return False


def _const_spec(shape, single_buffer):
    """BlockSpec for a grid-index-invariant (weight) input."""
    idx = lambda *_, _n=len(shape): (0,) * _n
    if single_buffer:
        # Index-invariant blocks have no re-DMA to overlap: single-buffer them to
        # halve their VMEM footprint (matters most on v7x's 64 MiB).
        return pl.BlockSpec(shape, idx, pipeline_mode=pl.Buffered(1))
    return pl.BlockSpec(shape, idx)


def _seq_tile_candidates(S):
    return [S] + [c for c in (1024, 512, 256, 128) if c < S and S % c == 0]


def _pick_kv_proj_tile(S):
    if S <= 512:
        return S
    return next((c for c in (512, 256, 128) if S % c == 0), S)


def _pick_tiles(S, H, I, num_heads, weight_bytes, budget):
    """Choose (tq, tk, ffn_chunk) that fit this generation's VMEM budget."""
    hd = H // num_heads
    ffn_cap = 512 if budget < (80 << 20) else 1024          # smaller chunks on v7x
    ffn_chunk = next((c for c in (ffn_cap, 512, 256, 128)
                      if c <= I and I % c == 0), I)
    cands = _seq_tile_candidates(S)
    for tq in cands:
        for tk in cands:
            act = 4 * (3 * num_heads * tq * tk               # s, p, exp temps (f32)
                       + num_heads * tq * (hd + 2)           # acc, m, l scratch
                       + 3 * tq * max(ffn_chunk, H))         # h1 / FFN temps
            act += 2 * tq * H                                # bf16 Q scratch
            act += 2 * 2 * (2 * tk * H + tq * H)             # 2-buffered K,V,x blocks
            if 2 * weight_bytes + act + (2 << 20) <= budget:
                return tq, tk, ffn_chunk
    return cands[-1], cands[-1], ffn_chunk


# ---------------------------------------------------------------------------
# kernel 1: fused K/V projection (once per layer, bf16 to HBM)
# ---------------------------------------------------------------------------

def kv_proj_kernel(x_ref, wkv_ref, bkv_ref, k_ref, v_ref, *, H):
    x_b = x_ref[0].astype(jnp.bfloat16)                       # (ts, H)
    kv = jnp.dot(x_b, wkv_ref[...],
                 preferred_element_type=jnp.float32) + bkv_ref[...]
    k_ref[0] = kv[:, :H].astype(k_ref.dtype)
    v_ref[0] = kv[:, H:].astype(v_ref.dtype)


def kv_projection(x, wkv, bkv, budget, single_buffer):
    B, S, H = x.shape
    ts = _pick_kv_proj_tile(S)
    n_st = S // ts
    return pl.pallas_call(
        functools.partial(kv_proj_kernel, H=H),
        out_shape=(jax.ShapeDtypeStruct((B, S, H), jnp.bfloat16),
                   jax.ShapeDtypeStruct((B, S, H), jnp.bfloat16)),
        grid_spec=pltpu.PrefetchScalarGridSpec(
            num_scalar_prefetch=0,
            grid=(B, n_st),
            in_specs=[pl.BlockSpec((1, ts, H), lambda b, si: (b, si, 0)),
                      _const_spec((H, 2 * H), single_buffer),
                      _const_spec((1, 2 * H), single_buffer)],
            out_specs=[pl.BlockSpec((1, ts, H), lambda b, si: (b, si, 0)),
                       pl.BlockSpec((1, ts, H), lambda b, si: (b, si, 0))]),
        compiler_params=pltpu.CompilerParams(
            dimension_semantics=("parallel", "parallel"),
            vmem_limit_bytes=budget),
    )(x, wkv, bkv)


# ---------------------------------------------------------------------------
# kernel 2: attention (flash-style over KV tiles) + output proj + FFN + LNs
# ---------------------------------------------------------------------------

def attn_ffn_kernel(x_ref, amask_ref, k_ref, v_ref,
                    wq_ref, bq_ref, wo_ref, bo_ref, g1_ref, be1_ref,
                    wi_ref, bi_ref, w2_ref, b2_ref, g2_ref, be2_ref,
                    out_ref,
                    q_sc, m_sc, l_sc, acc_sc,
                    *, num_heads, tq, tk, ffn_chunk):
    NH = num_heads
    H = x_ref.shape[-1]
    hd = H // NH
    kv_i = pl.program_id(2)

    @pl.when(kv_i == 0)
    def _init():
        # Q for THIS tile's rows only; 1/sqrt(head_dim) pre-folded into wq/bq.
        x_b = x_ref[0].astype(jnp.bfloat16)                   # (tq, H)
        q = jnp.dot(x_b, wq_ref[...],
                    preferred_element_type=jnp.float32) + bq_ref[...]
        q_sc[...] = q.astype(jnp.bfloat16)
        m_sc[...] = jnp.full_like(m_sc, -jnp.inf)
        l_sc[...] = jnp.zeros_like(l_sc)
        acc_sc[...] = jnp.zeros_like(acc_sc)

    # ---- one KV chunk of online softmax ------------------------------------
    qh = q_sc[...].reshape(tq, NH, hd)                        # bf16
    kh = k_ref[0].reshape(tk, NH, hd)                         # bf16
    vh = v_ref[0].reshape(tk, NH, hd)                         # bf16

    s = jnp.einsum('qhd,khd->hqk', qh, kh,
                   preferred_element_type=jnp.float32)        # (NH, tq, tk)
    s = s + amask_ref[0]                                      # (1, tk) broadcast

    m_new = jnp.maximum(m_sc[...], jnp.max(s, axis=-1, keepdims=True))
    alpha = jnp.exp(m_sc[...] - m_new)
    p = jnp.exp(s - m_new)
    l_sc[...] = alpha * l_sc[...] + jnp.sum(p, axis=-1, keepdims=True)
    acc_sc[...] = alpha * acc_sc[...] + jnp.einsum(
        'hqk,khd->hqd', p.astype(jnp.bfloat16), vh,
        preferred_element_type=jnp.float32)
    m_sc[...] = m_new

    # ---- epilogue: finish attention, residual+LN, FFN, LN, store ------------
    @pl.when(kv_i == pl.num_programs(2) - 1)
    def _epilogue():
        inv_l = pl.reciprocal(l_sc[...], approx=True)         # EUP slot
        ctx = acc_sc[...] * inv_l                             # (NH, tq, hd)
        ctx = jnp.transpose(ctx, (1, 0, 2)).reshape(tq, H)    # head merge, once/tile

        attn = jnp.dot(ctx.astype(jnp.bfloat16), wo_ref[...],
                       preferred_element_type=jnp.float32) + bo_ref[...]
        h1 = _layer_norm(attn + x_ref[0].astype(jnp.float32),
                         g1_ref[...], be1_ref[...])

        h1_b = h1.astype(jnp.bfloat16)
        I = wi_ref.shape[1]
        n_chunks = I // ffn_chunk

        def ffn_body(j, acc):
            # TODO(synk): switch to exact erf GELU if the cehrbert config uses
            # 'gelu' rather than the tanh-approx 'gelu_new'.
            start = pl.multiple_of(j * ffn_chunk, ffn_chunk)
            inter = jax.nn.gelu(
                jnp.dot(h1_b, wi_ref[:, pl.ds(start, ffn_chunk)],
                        preferred_element_type=jnp.float32)
                + bi_ref[:, pl.ds(start, ffn_chunk)],
                approximate=True)
            return acc + jnp.dot(inter.astype(jnp.bfloat16),
                                 w2_ref[pl.ds(start, ffn_chunk), :],
                                 preferred_element_type=jnp.float32)

        ffn = jax.lax.fori_loop(0, n_chunks, ffn_body,
                                jnp.zeros((tq, H), jnp.float32), unroll=True)
        h2 = _layer_norm(ffn + b2_ref[...] + h1, g2_ref[...], be2_ref[...])
        out_ref[0] = h2.astype(out_ref.dtype)


def bert_layer_pallas(x, add_mask, p, num_heads, out_dtype=jnp.float32):
    """One BERT encoder layer. x: (B, S, H); add_mask: (B, 1, S) additive f32."""
    B, S, H = x.shape
    I = p['wi'].shape[1]
    hd = H // num_heads
    budget = _vmem_budget_bytes()
    single_buffer = _single_buffer_supported()

    main_weights = ('wq', 'bq', 'wo', 'bo', 'ln1_g', 'ln1_b',
                    'wi', 'bi', 'w2', 'b2', 'ln2_g', 'ln2_b')
    weight_bytes = sum(int(p[n].size) * p[n].dtype.itemsize for n in main_weights)
    tq, tk, ffn_chunk = _pick_tiles(S, H, I, num_heads, weight_bytes, budget)
    n_qt, n_kt = S // tq, S // tk

    # K/V once per layer (no per-query-tile recompute), bf16 in HBM.
    k, v = kv_projection(x, p['wkv'], p['bkv'], budget, single_buffer)

    flops = (B * n_qt * (4 * tq * H * H + 4 * tq * H * I)
             + B * n_qt * n_kt * 4 * tq * tk * H)
    transcendentals = B * n_qt * n_kt * num_heads * tq * tk + B * n_qt * tq * I
    bytes_accessed = (B * n_qt * (x.dtype.itemsize * tq * H
                                  + jnp.dtype(out_dtype).itemsize * tq * H
                                  + weight_bytes)
                      + B * n_qt * n_kt * (4 * tk * H + 4 * tk))
    cost = pl.CostEstimate(flops=int(flops),
                           transcendentals=int(transcendentals),
                           bytes_accessed=int(bytes_accessed))

    kernel = functools.partial(attn_ffn_kernel, num_heads=num_heads,
                               tq=tq, tk=tk, ffn_chunk=ffn_chunk)

    in_specs = [
        pl.BlockSpec((1, tq, H), lambda b, qi, kv: (b, qi, 0)),   # x tile (Q + residual)
        pl.BlockSpec((1, 1, tk), lambda b, qi, kv: (b, 0, kv)),   # additive mask chunk
        pl.BlockSpec((1, tk, H), lambda b, qi, kv: (b, kv, 0)),   # K chunk (bf16)
        pl.BlockSpec((1, tk, H), lambda b, qi, kv: (b, kv, 0)),   # V chunk (bf16)
        _const_spec((H, H), single_buffer), _const_spec((1, H), single_buffer),   # wq, bq
        _const_spec((H, H), single_buffer), _const_spec((1, H), single_buffer),   # wo, bo
        _const_spec((1, H), single_buffer), _const_spec((1, H), single_buffer),   # ln1
        _const_spec((H, I), single_buffer), _const_spec((1, I), single_buffer),   # wi, bi
        _const_spec((I, H), single_buffer), _const_spec((1, H), single_buffer),   # w2, b2
        _const_spec((1, H), single_buffer), _const_spec((1, H), single_buffer),   # ln2
    ]

    return pl.pallas_call(
        kernel,
        out_shape=jax.ShapeDtypeStruct((B, S, H), out_dtype),
        grid_spec=pltpu.PrefetchScalarGridSpec(
            num_scalar_prefetch=0,
            grid=(B, n_qt, n_kt),
            in_specs=in_specs,
            out_specs=pl.BlockSpec((1, tq, H), lambda b, qi, kv: (b, qi, 0)),
            scratch_shapes=[
                pltpu.VMEM((tq, H), jnp.bfloat16),                 # Q tile
                pltpu.VMEM((num_heads, tq, 1), jnp.float32),       # running max
                pltpu.VMEM((num_heads, tq, 1), jnp.float32),       # running sum
                pltpu.VMEM((num_heads, tq, hd), jnp.float32),      # context acc
            ]),
        compiler_params=pltpu.CompilerParams(
            dimension_semantics=("parallel", "parallel", "arbitrary"),
            vmem_limit_bytes=budget),
        cost_estimate=cost,
    )(x, add_mask, k, v,
      p['wq'], p['bq'], p['wo'], p['bo'], p['ln1_g'], p['ln1_b'],
      p['wi'], p['bi'], p['w2'], p['b2'], p['ln2_g'], p['ln2_b'])


# ---------------------------------------------------------------------------
# parameters & Aggregator wrapper
# ---------------------------------------------------------------------------

def init_layer_params(key, H, I):
    """Plain (PyTorch-like, but (in, out)) f32 parameters for one BERT layer."""
    ks = jax.random.split(key, 6)
    w = lambda k, shape: jax.random.normal(k, shape, jnp.float32) * 0.02
    return dict(
        wq=w(ks[0], (H, H)), bq=jnp.zeros((1, H), jnp.float32),
        wk=w(ks[1], (H, H)), bk=jnp.zeros((1, H), jnp.float32),
        wv=w(ks[2], (H, H)), bv=jnp.zeros((1, H), jnp.float32),
        wo=w(ks[3], (H, H)), bo=jnp.zeros((1, H), jnp.float32),
        ln1_g=jnp.ones((1, H), jnp.float32), ln1_b=jnp.zeros((1, H), jnp.float32),
        wi=w(ks[4], (H, I)), bi=jnp.zeros((1, I), jnp.float32),
        w2=w(ks[5], (I, H)), b2=jnp.zeros((1, H), jnp.float32),
        ln2_g=jnp.ones((1, H), jnp.float32), ln2_b=jnp.zeros((1, H), jnp.float32),
    )


def prepare_layer_params(p, num_heads):
    """Pack params for the kernels: bf16 weights, f32 biases / LayerNorm params,
    1/sqrt(head_dim) folded into wq/bq, wk|wv fused for the K/V kernel."""
    H = p['wq'].shape[0]
    scale = 1.0 / math.sqrt(H // num_heads)
    return dict(
        wq=(p['wq'] * scale).astype(jnp.bfloat16),
        bq=(p['bq'] * scale).astype(jnp.float32),
        wkv=jnp.concatenate([p['wk'], p['wv']], axis=1).astype(jnp.bfloat16),
        bkv=jnp.concatenate([p['bk'], p['bv']], axis=1).astype(jnp.float32),
        wo=p['wo'].astype(jnp.bfloat16), bo=p['bo'].astype(jnp.float32),
        ln1_g=p['ln1_g'].astype(jnp.float32), ln1_b=p['ln1_b'].astype(jnp.float32),
        wi=p['wi'].astype(jnp.bfloat16), bi=p['bi'].astype(jnp.float32),
        w2=p['w2'].astype(jnp.bfloat16), b2=p['b2'].astype(jnp.float32),
        ln2_g=p['ln2_g'].astype(jnp.float32), ln2_b=p['ln2_b'].astype(jnp.float32),
    )


def aggregator_forward(hidden_state, mask, layer_params, num_heads, encounter=True):
    """Pallas version of Aggregator.forward.
    hidden_state: (B, S, H) float32; mask: (B, S) {0,1}. Returns (B, S, H) f32."""
    # TODO(synk): the `encounter` flag of cehrbert's BertEncoder is accepted but
    # does not alter the standard BERT layer math implemented here.
    del encounter
    # Aggregator.forward mask handling, computed ONCE: (1 - mask) * -10000.
    add_mask = ((1.0 - mask.astype(jnp.float32)) * -10000.0)[:, None, :]
    prepped = [prepare_layer_params(p, num_heads) for p in layer_params]
    # TODO(synk): cross-pallas_call weight prefetch (P10) of layer l+1's weights
    # while layer l computes is not implemented here.
    h = hidden_state
    for li, p in enumerate(prepped):
        # bf16 inter-layer hidden halves the HBM roundtrip; final layer is f32.
        out_dtype = jnp.float32 if li == len(prepped) - 1 else jnp.bfloat16
        h = bert_layer_pallas(h, add_mask, p, num_heads, out_dtype=out_dtype)
    return h


if __name__ == "__main__":
    B, S, H, NH, I, L = 2, 8, 32, 4, 64, 2  # batch, seq, hidden, heads, ffn, layers

    key = jax.random.PRNGKey(0)
    k_x, k_p = jax.random.split(key)

    hidden_state = jax.random.normal(k_x, (B, S, H), jnp.float32)
    lengths = jnp.array([8, 5], jnp.int32)
    mask = (jnp.arange(S)[None, :] < lengths[:, None]).astype(jnp.float32)  # (B, S)

    layer_keys = jax.random.split(k_p, L)
    layer_params = [init_layer_params(lk, H, I) for lk in layer_keys]

    out = aggregator_forward(hidden_state, mask, layer_params, NH, encounter=True)
    out = jax.block_until_ready(out)
    assert out.shape == (B, S, H) and out.dtype == jnp.float32
    assert bool(jnp.all(jnp.isfinite(out)))
    print("KERNEL_OK")
</pallas_src>

<mosaic_0001>
module attributes {stable_mosaic.version = 11 : i64} {
  func.func @kv_proj_kernel(%arg0: i32, %arg1: i32, %arg2: memref<1x8x32xf32, #tpu.memory_space<vmem>>, %arg3: memref<32x64xbf16, #tpu.memory_space<vmem>>, %arg4: memref<1x64xf32, #tpu.memory_space<vmem>>, %arg5: memref<1x8x32xbf16, #tpu.memory_space<vmem>>, %arg6: memref<1x8x32xbf16, #tpu.memory_space<vmem>>) attributes {dimension_semantics = [#tpu.dimension_semantics<parallel>, #tpu.dimension_semantics<parallel>], iteration_bounds = array<i64: 2, 1>, scalar_prefetch = 0 : i64, scratch_operands = 0 : i64, tpu.core_type = #tpu.core_type<tc>, window_params = [{transform_indices = @transform_0, window_bounds = array<i64: 1, 8, 32>}, {pipeline_mode = #tpu.pipeline_mode<synchronous>, transform_indices = @transform_1, window_bounds = array<i64: 32, 64>}, {pipeline_mode = #tpu.pipeline_mode<synchronous>, transform_indices = @transform_2, window_bounds = array<i64: 1, 64>}, {transform_indices = @transform_3, window_bounds = array<i64: 1, 8, 32>}, {transform_indices = @transform_4, window_bounds = array<i64: 1, 8, 32>}]} {
    %c0 = arith.constant 0 : index
    %c0_0 = arith.constant 0 : index
    %c0_1 = arith.constant 0 : index
    %0 = vector.load %arg2[%c0, %c0_0, %c0_1] : memref<1x8x32xf32, #tpu.memory_space<vmem>>, vector<1x8x32xf32>
    %1 = vector.shape_cast %0 : vector<1x8x32xf32> to vector<8x32xf32>
    %2 = arith.truncf %1 : vector<8x32xf32> to vector<8x32xbf16>
    %c0_2 = arith.constant 0 : index
    %c0_3 = arith.constant 0 : index
    %3 = vector.load %arg3[%c0_2, %c0_3] : memref<32x64xbf16, #tpu.memory_space<vmem>>, vector<32x64xbf16>
    %cst = arith.constant dense<0.000000e+00> : vector<8x64xf32>
    %4 = tpu.matmul %2, %3, %cst {dimension_numbers = #tpu.dot_dimension_numbers<[1], [0], [0], [1], [0, 0, 1, 1], [], []>} : vector<8x32xbf16>, vector<32x64xbf16>, vector<8x64xf32> -> vector<8x64xf32>
    %c0_4 = arith.constant 0 : index
    %c0_5 = arith.constant 0 : index
    %5 = vector.load %arg4[%c0_4, %c0_5] : memref<1x64xf32, #tpu.memory_space<vmem>>, vector<1x64xf32>
    %6 = vector.broadcast %5 : vector<1x64xf32> to vector<8x64xf32>
    %7 = arith.addf %4, %6 : vector<8x64xf32>
    %8 = vector.extract_strided_slice %7 {offsets = [0, 0], sizes = [8, 32], strides = [1, 1]} : vector<8x64xf32> to vector<8x32xf32>
    %9 = arith.truncf %8 : vector<8x32xf32> to vector<8x32xbf16>
    %c0_6 = arith.constant 0 : index
    %c0_7 = arith.constant 0 : index
    %c0_8 = arith.constant 0 : index
    %10 = vector.load %arg5[%c0_6, %c0_7, %c0_8] : memref<1x8x32xbf16, #tpu.memory_space<vmem>>, vector<1x8x32xbf16>
    %11 = vector.shape_cast %10 : vector<1x8x32xbf16> to vector<8x32xbf16>
    %12 = vector.shape_cast %9 : vector<8x32xbf16> to vector<1x8x32xbf16>
    tpu.vector_store %arg5[%c0_6, %c0_7, %c0_8], %12 {strides = array<i32>} : memref<1x8x32xbf16, #tpu.memory_space<vmem>>, vector<1x8x32xbf16>,
    %13 = vector.extract_strided_slice %7 {offsets = [0, 32], sizes = [8, 32], strides = [1, 1]} : vector<8x64xf32> to vector<8x32xf32>
    %14 = arith.truncf %13 : vector<8x32xf32> to vector<8x32xbf16>
    %c0_9 = arith.constant 0 : index
    %c0_10 = arith.constant 0 : index
    %c0_11 = arith.constant 0 : index
    %15 = vector.load %arg6[%c0_9, %c0_10, %c0_11] : memref<1x8x32xbf16, #tpu.memory_space<vmem>>, vector<1x8x32xbf16>
    %16 = vector.shape_cast %15 : vector<1x8x32xbf16> to vector<8x32xbf16>
    %17 = vector.shape_cast %14 : vector<8x32xbf16> to vector<1x8x32xbf16>
    tpu.vector_store %arg6[%c0_9, %c0_10, %c0_11], %17 {strides = array<i32>} : memref<1x8x32xbf16, #tpu.memory_space<vmem>>, vector<1x8x32xbf16>,
    return
  }
  func.func @transform_0(%arg0: i32, %arg1: i32) -> (i32, i32, i32) {
    %c0_i32 = arith.constant 0 : i32
    %c0_i32_0 = arith.constant 0 : i32
    return %arg0, %arg1, %c0_i32 : i32, i32, i32
  }
  func.func @transform_1(%arg0: i32, %arg1: i32) -> (i32, i32) {
    %c0_i32 = arith.constant 0 : i32
    %c0_i32_0 = arith.constant 0 : i32
    %c0_i32_1 = arith.constant 0 : i32
    return %c0_i32, %c0_i32_0 : i32, i32
  }
  func.func @transform_2(%arg0: i32, %arg1: i32) -> (i32, i32) {
    %c0_i32 = arith.constant 0 : i32
    %c0_i32_0 = arith.constant 0 : i32
    %c0_i32_1 = arith.constant 0 : i32
    return %c0_i32, %c0_i32_0 : i32, i32
  }
  func.func @transform_3(%arg0: i32, %arg1: i32) -> (i32, i32, i32) {
    %c0_i32 = arith.constant 0 : i32
    %c0_i32_0 = arith.constant 0 : i32
    return %arg0, %arg1, %c0_i32 : i32, i32, i32
  }
  func.func @transform_4(%arg0: i32, %arg1: i32) -> (i32, i32, i32) {
    %c0_i32 = arith.constant 0 : i32
    %c0_i32_0 = arith.constant 0 : i32
    return %arg0, %arg1, %c0_i32 : i32, i32, i32
  }
}

</mosaic_0001>

<llo_original>
// kernel: tpu_custom_call.1
$region0: #{tpu_custom_call.1}
  #allocation0 [shape = 'u32[]', space=smem, size = 0x4, offset = 0x4, fixed_abs, tag = 'smem constant byte address 0x4 - core index']
  #allocation1 [shape = 'u32[144,128]{1,0:T(1,128)}', space=vmem, size = 0x12000, scoped, tag = 'internal scratch']
  %s0 = inlined_call_operand.hbm [shape: f32[2,8,32], index: 0, kind: input, shape index: {}]
  %s1 = inlined_call_operand.hbm [shape: bf16[32,64], index: 1, kind: input, shape index: {}]
  %s2 = inlined_call_operand.hbm [shape: f32[1,64], index: 2, kind: input, shape index: {}]
  %s3 = inlined_call_operand.hbm [shape: bf16[2,8,32], index: 3, kind: output, shape index: {0}]
  %s4 = inlined_call_operand.hbm [shape: bf16[2,8,32], index: 4, kind: output, shape index: {1}]
  %5 = xla_tuple %s3, %s4
  %s6 = sld [smem:[#allocation0]]
  $region65: #{tpu_custom_call.1} parent=0
    _
  %s8 = ssub.s32 1, %s6
  %s9 = scalar_select 0, %s8, %s6
  $region1: #{tpu_custom_call.1} parent=0
    #allocation2 [shape = 'u8[8192]{0}', space=vmem, size = 0x2000, scoped, tag = 'input window, operand 0']
    #allocation3 [shape = 's32[2]{0}', space=sflag, size = 0x8, scoped, tag = 'scoped memory for tpu_custom_call.1']
    #allocation4 [shape = 's32[2]{0}', space=sflag, size = 0x8, scoped, tag = 'scoped memory for tpu_custom_call.1']
    #allocation5 [shape = 'u8[8192]{0}', space=vmem, size = 0x2000, scoped, tag = 'input window, operand 1, single buffered']
    #allocation6 [shape = 's32[1]{0}', space=sflag, size = 0x4, scoped, tag = 'scoped memory for tpu_custom_call.1']
    #allocation7 [shape = 'u8[512]{0}', space=vmem, size = 0x400, scoped, tag = 'input window, operand 2, single buffered']
    #allocation8 [shape = 'u8[4096]{0}', space=vmem, size = 0x1000, scoped, tag = 'output window, operand 0']
    #allocation9 [shape = 'u8[4096]{0}', space=vmem, size = 0x1000, scoped, tag = 'output window, operand 1']
    #allocation10 [shape = 's32[2]{0}', space=sflag, size = 0x8, scoped, tag = 'scoped memory for tpu_custom_call.1']
    %10 = vsyncpa [#allocation3], 0
    %s11 = scalar_lea.sflag [#allocation3], 1
    %12 = vsyncpa %s11, 0
    %13 = vsyncpa [#allocation6], 0
    %14 = vsyncpa [#allocation4], 0
    %s15 = scalar_lea.sflag [#allocation4], 1
    %16 = vsyncpa %s15, 0
    %17 = vsyncpa [#allocation10], 0
    %s18 = scalar_lea.sflag [#allocation10], 1
    %19 = vsyncpa %s18, 0
    loop: start=0, step=1, limit=4
    $region2: #{tpu_custom_call.1} parent=1 // loop_pre_header
      _
    $region3: #{tpu_custom_call.1} parent=1 // loop_header
      %s21 = sphi 0, %s25
      %p22 = scmp.ge.s32.totalorder %s21, 4
      %s28 = sphi 0, %s40
      %s29 = sphi 0, %s36
      %s30 = sphi 0, %s28
      %s31 = sphi 0, %s29
      %s32 = sphi 0, %s30
      %s33 = sphi 0, %s31
      %s45 = sphi 0, %s47
      %s48 = sphi 0, %s45
      %s49 = sphi 0, %s48
      %s65 = sphi 0, %s49
      %s69 = sphi 0, %s69
      %s71 = sphi 0, %s69
      %s72 = sphi 0, %s71
      %s86 = sphi 0, %s72
      %s90 = sphi 0, %s90
      %s92 = sphi 0, %s90
      %s93 = sphi 0, %s92
      %s107 = sphi 0, %s93
      %s115 = sphi 0, %s117
      %s118 = sphi 0, %s115
      %s119 = sphi 0, %s118
      %s135 = sphi 0, %s119
      %s143 = sphi 0, %s145
      %s146 = sphi 0, %s143
      %s147 = sphi 0, %s146
      %s163 = sphi 0, %s147
    $region4: #{tpu_custom_call.1} parent=1 // loop_header_branch
      %24 = sbr.rel (%p22) target = $region8
    $region5: #{tpu_custom_call.1} parent=1 // loop_body
      %s26 = ssub.s32 %s21, 1
      %s27 = ssub.s32 %s21, 2
      %s34 = sadd.s32 1, %s29
      %p35 = scmp.ge.s32.totalorder %s34, 1
      %s36 = scalar_select %p35, 0, %s34
      %s37 = sadd.s32 1, %s28
      %s38 = scalar_select %p35, %s37, %s28
      %p39 = scmp.ge.s32.totalorder %s38, 2
      %s40 = scalar_select %p39, 0, %s38
      %s41 = ssub.s32 %s28, %s40
      %s42 = ssub.s32 %s29, %s36
      %s43 = sor.u32 %s41, %s42
      %p44 = scmp.eq.s32.totalorder %s43, 0
      %s46 = sadd.s32 %s45, 1
      %s47 = scalar_select %p44, %s45, %s46
      %p50 = pneg %p44
      %p51 = scmp.eq.s32.totalorder %s21, 1
      %p52 = por %p50, %p51
      %p53 = scmp.ne.s32.totalorder %s45, %s48
      %p54 = scmp.eq.s32.totalorder %s21, 0
      %p55 = por %p53, %p54
      %p56 = scmp.ne.s32.totalorder %s45, %s48
      %p57 = scmp.eq.s32.totalorder %s26, 1
      %p58 = por %p56, %p57
      %p59 = scmp.ne.s32.totalorder %s48, %s49
      %p60 = scmp.eq.s32.totalorder %s26, 0
      %p61 = por %p59, %p60
      %p62 = scmp.ne.s32.totalorder %s48, %s49
      %p63 = scmp.eq.s32.totalorder %s27, 1
      %p64 = por %p62, %p63
      %p66 = scmp.ne.s32.totalorder %s49, %s65
      %p67 = scmp.eq.s32.totalorder %s27, 0
      %p68 = por %p66, %p67
      %s70 = sadd.s32 %s69, 1
      %p73 = scmp.eq.s32.totalorder %s21, 1
      %p74 = scmp.ne.s32.totalorder %s69, %s71
      %p75 = scmp.eq.s32.totalorder %s21, 0
      %p76 = por %p74, %p75
      %p77 = scmp.ne.s32.totalorder %s69, %s71
      %p78 = scmp.eq.s32.totalorder %s26, 1
      %p79 = por %p77, %p78
      %p80 = scmp.ne.s32.totalorder %s71, %s72
      %p81 = scmp.eq.s32.totalorder %s26, 0
      %p82 = por %p80, %p81
      %p83 = scmp.ne.s32.totalorder %s71, %s72
      %p84 = scmp.eq.s32.totalorder %s27, 1
      %p85 = por %p83, %p84
      %p87 = scmp.ne.s32.totalorder %s72, %s86
      %p88 = scmp.eq.s32.totalorder %s27, 0
      %p89 = por %p87, %p88
      %s91 = sadd.s32 %s90, 1
      %p94 = scmp.eq.s32.totalorder %s21, 1
      %p95 = scmp.ne.s32.totalorder %s90, %s92
      %p96 = scmp.eq.s32.totalorder %s21, 0
      %p97 = por %p95, %p96
      %p98 = scmp.ne.s32.totalorder %s90, %s92
      %p99 = scmp.eq.s32.totalorder %s26, 1
      %p100 = por %p98, %p99
      %p101 = scmp.ne.s32.totalorder %s92, %s93
      %p102 = scmp.eq.s32.totalorder %s26, 0
      %p103 = por %p101, %p102
      %p104 = scmp.ne.s32.totalorder %s92, %s93
      %p105 = scmp.eq.s32.totalorder %s27, 1
      %p106 = por %p104, %p105
      %p108 = scmp.ne.s32.totalorder %s93, %s107
      %p109 = scmp.eq.s32.totalorder %s27, 0
      %p110 = por %p108, %p109
      %s111 = ssub.s32 %s28, %s40
      %s112 = ssub.s32 %s29, %s36
      %s113 = sor.u32 %s111, %s112
      %p114 = scmp.eq.s32.totalorder %s113, 0
      %s116 = sadd.s32 %s115, 1
      %s117 = scalar_select %p114, %s115, %s116
      %p120 = pneg %p114
      %p121 = scmp.eq.s32.totalorder %s21, 1
      %p122 = por %p120, %p121
      %p123 = scmp.ne.s32.totalorder %s115, %s118
      %p124 = scmp.eq.s32.totalorder %s21, 0
      %p125 = por %p123, %p124
      %p126 = scmp.ne.s32.totalorder %s115, %s118
      %p127 = scmp.eq.s32.totalorder %s26, 1
      %p128 = por %p126, %p127
      %p129 = scmp.ne.s32.totalorder %s118, %s119
      %p130 = scmp.eq.s32.totalorder %s26, 0
      %p131 = por %p129, %p130
      %p132 = scmp.ne.s32.totalorder %s118, %s119
      %p133 = scmp.eq.s32.totalorder %s27, 1
      %p134 = por %p132, %p133
      %p136 = scmp.ne.s32.totalorder %s119, %s135
      %p137 = scmp.eq.s32.totalorder %s27, 0
      %p138 = por %p136, %p137
      %s139 = ssub.s32 %s28, %s40
      %s140 = ssub.s32 %s29, %s36
      %s141 = sor.u32 %s139, %s140
      %p142 = scmp.eq.s32.totalorder %s141, 0
      %s144 = sadd.s32 %s143, 1
      %s145 = scalar_select %p142, %s143, %s144
      %p148 = pneg %p142
      %p149 = scmp.eq.s32.totalorder %s21, 1
      %p150 = por %p148, %p149
      %p151 = scmp.ne.s32.totalorder %s143, %s146
      %p152 = scmp.eq.s32.totalorder %s21, 0
      %p153 = por %p151, %p152
      %p154 = scmp.ne.s32.totalorder %s143, %s146
      %p155 = scmp.eq.s32.totalorder %s26, 1
      %p156 = por %p154, %p155
      %p157 = scmp.ne.s32.totalorder %s146, %s147
      %p158 = scmp.eq.s32.totalorder %s26, 0
      %p159 = por %p157, %p158
      %p160 = scmp.ne.s32.totalorder %s146, %s147
      %p161 = scmp.eq.s32.totalorder %s27, 1
      %p162 = por %p160, %p161
      %p164 = scmp.ne.s32.totalorder %s147, %s163
      %p165 = scmp.eq.s32.totalorder %s27, 0
      %p166 = por %p164, %p165
      %p167 = scmp.le.s32.totalorder 1, %s21
      %p168 = scmp.lt.s32.totalorder %s21, 3
      %p169 = pnand %p167, %p168
      %p170 = pneg %p169
      // Predicated region
      $region9: #{tpu_custom_call.1} parent=5 // pred_check
        _
      $region10: #{tpu_custom_call.1} parent=5 // pred_check_branch
        %172 = sbr.rel (%p169) target = $region12
      $region11: #{tpu_custom_call.1} parent=5 // pred_region
        %s173 = ssub.s32 %s21, 1
        // Predicated region
        $region13: #{tpu_custom_call.1} parent=11 // pred_check
          %p174 = pneg %p82
        $region14: #{tpu_custom_call.1} parent=11 // pred_check_branch
          %176 = sbr.rel (%p174) target = $region16
        $region15: #{tpu_custom_call.1} parent=11 // pred_region
          %s178 = ssub.s32 256, 256
          %179 = vsyncadd [#allocation6], %s178
          %s180 = sshll.u32 [#allocation5], 4
          %s181 = int_to_ptr.vmem [resolvable:$true] %s180
          %186 = dma.hbm_to_vmem [thread:$0]  %s1, 256, %s181, [#allocation6], 64, 64, 4
        $region16: #{tpu_custom_call.1} parent=11 // pred_fallthru
          _
        // Predicated region
        $region17: #{tpu_custom_call.1} parent=11 // pred_check
          %p187 = pneg %p103
        $region18: #{tpu_custom_call.1} parent=11 // pred_check_branch
          %189 = sbr.rel (%p187) target = $region20
        $region19: #{tpu_custom_call.1} parent=11 // pred_region
          %s191 = ssub.s32 16, 16
          %192 = vsyncadd [#allocation6], %s191
          %s194 = sshll.u32 [#allocation7], 4
          %s195 = int_to_ptr.vmem [resolvable:$true] %s194
          %197 = dma.hbm_to_vmem [thread:$0]  %s2, 16, %s195, [#allocation6]
        $region20: #{tpu_custom_call.1} parent=11 // pred_fallthru
          _
      $region12: #{tpu_custom_call.1} parent=5 // pred_fallthru
        _
      %p198 = scmp.lt.s32.totalorder %s21, 2
      // Predicated region
      $region21: #{tpu_custom_call.1} parent=5 // pred_check
        %p199 = pneg %p198
      $region22: #{tpu_custom_call.1} parent=5 // pred_check_branch
        %201 = sbr.rel (%p199) target = $region24
      $region23: #{tpu_custom_call.1} parent=5 // pred_region
        // Predicated region
        $region25: #{tpu_custom_call.1} parent=23 // pred_check
          %p202 = pneg %p55
        $region26: #{tpu_custom_call.1} parent=23 // pred_check_branch
          %204 = sbr.rel (%p202) target = $region28
        $region27: #{tpu_custom_call.1} parent=23 // pred_region
          %s205 = sand.u32 %s45, 1
          %s206 = scalar_lea.sflag [#allocation3], %s205
          %s207 = sand.u32 %s45, 1
          %s208 = smul.addr %s207, 8
          %s209 = scalar_lea.vmem [#allocation2], %s208
          %s211 = ssub.s32 128, 128
          %212 = vsyncadd %s206, %s211
          %s213 = sadd.s32 %s29, %s28
          %s214 = smul.addr %s213, 128
          %s215 = scalar_lea.hbm %s0, %s214
          %s217 = sshll.u32 %s209, 4
          %s218 = int_to_ptr.vmem [resolvable:$true] %s217
          %220 = dma.hbm_to_vmem [thread:$0]  %s215, 128, %s218, %s206
        $region28: #{tpu_custom_call.1} parent=23 // pred_fallthru
          _
      $region24: #{tpu_custom_call.1} parent=5 // pred_fallthru
        _
      %p221 = scmp.le.s32.totalorder 1, %s21
      %p222 = scmp.lt.s32.totalorder %s21, 3
      %p223 = pnand %p221, %p222
      %p224 = pneg %p223
      // Predicated region
      $region29: #{tpu_custom_call.1} parent=5 // pred_check
        _
      $region30: #{tpu_custom_call.1} parent=5 // pred_check_branch
        %226 = sbr.rel (%p223) target = $region32
      $region31: #{tpu_custom_call.1} parent=5 // pred_region
        %s227 = ssub.s32 %s21, 1
        %s228 = sand.u32 %s48, 1
        %s229 = scalar_lea.sflag [#allocation3], %s228
        %s230 = sand.u32 %s48, 1
        %s231 = smul.addr %s230, 8
        %s232 = scalar_lea.vmem [#allocation2], %s231
        // Predicated region
        $region33: #{tpu_custom_call.1} parent=31 // pred_check
          %p233 = pneg %p61
        $region34: #{tpu_custom_call.1} parent=31 // pred_check_branch
          %235 = sbr.rel (%p233) target = $region36
        $region35: #{tpu_custom_call.1} parent=31 // pred_region
          %236 = dma.done %s229, 128
        $region36: #{tpu_custom_call.1} parent=31 // pred_fallthru
          _
        // Predicated region
        $region37: #{tpu_custom_call.1} parent=31 // pred_check
          %p237 = pneg %p82
        $region38: #{tpu_custom_call.1} parent=31 // pred_check_branch
          %239 = sbr.rel (%p237) target = $region40
        $region39: #{tpu_custom_call.1} parent=31 // pred_region
          %240 = dma.done [#allocation6], 256
        $region40: #{tpu_custom_call.1} parent=31 // pred_fallthru
          _
        // Predicated region
        $region41: #{tpu_custom_call.1} parent=31 // pred_check
          %p241 = pneg %p103
        $region42: #{tpu_custom_call.1} parent=31 // pred_check_branch
          %243 = sbr.rel (%p241) target = $region44
        $region43: #{tpu_custom_call.1} parent=31 // pred_region
          %244 = dma.done [#allocation6], 16
        $region44: #{tpu_custom_call.1} parent=31 // pred_fallthru
          _
        %s245 = sand.u32 %s48, 1
        %s246 = scalar_lea.sflag [#allocation3], %s245
        %s247 = sand.u32 %s48, 1
        %s248 = smul.addr %s247, 8
        %s249 = scalar_lea.vmem [#allocation2], %s248
        %p250 = pneg %p61
        %p251 = pneg %p58
        %p252 = pneg %p82
        %p253 = pneg %p79
        %p254 = pneg %p103
        %p255 = pneg %p100
        %p256 = pneg %p131
        %p257 = pneg %p128
        %s258 = sand.u32 %s118, 1
        %s259 = scalar_lea.sflag [#allocation4], %s258
        %s260 = sand.u32 %s118, 1
        %s261 = smul.addr %s260, 4
        %s262 = scalar_lea.vmem [#allocation8], %s261
        %p263 = pneg %p159
        %p264 = pneg %p156
        %s265 = sand.u32 %s146, 1
        %s266 = scalar_lea.sflag [#allocation10], %s265
        %s267 = sand.u32 %s146, 1
        %s268 = smul.addr %s267, 4
        %s269 = scalar_lea.vmem [#allocation9], %s268
        %v271 = vld [vmem:[%s232] sm:$0xff]
        %v272 = vpack.c.bf16 %v271, %v271
        %v273 = vld [vmem:[#allocation5] sm:$0xf]
        %v274 = vld [vmem:[#allocation5 + $0x4] sm:$0xf]
        %v275 = vld [vmem:[#allocation5 + $0x8] sm:$0xf]
        %v276 = vld [vmem:[#allocation5 + $0xc] sm:$0xf]
        %v277 = vld [vmem:[#allocation7] sm:$0x1]
        %v279 = vlaneseq
        %v280 = vshrl.u32 %v279, 7
        %v281 = vsub.s32 0, %v280
        %v282 = vrot.slane %v277, %v281
        %v288 = vunpack.c.l.b16 %v273
        %v289 = vunpack.c.l.b16 %v274
        %v290 = vunpack.c.l.b16 %v275
        %v291 = vunpack.c.l.b16 %v276
        %v292 = vpack.c.b16 %v289, %v288
        %v293 = vpack.c.b16 %v291, %v290
        %vm296 = vcmask 261120
        %v298 = vsel %vm296, %v272, 0
        %300 = vmatprep.subr.bf16.mxu0 0
        %301 = vmatpush1.bf16.msra.mxu0 %v292
        %302 = vmatprep.subr.bf16.mxu0 0
        %303 = vmatpush1.bf16.msra.mxu0 %v293
        %304 = vmatprep.subr.bf16.mxu0 0
        %305 = vmatpush1.bf16.msra.mxu0 0
        %306 = vmatprep.subr.bf16.mxu0 0
        %307 = vmatpush1.bf16.msra.mxu0 0
        %308 = vmatprep.subr.bf16.mxu0 0
        %309 = vmatpush1.bf16.msra.mxu0 0
        %310 = vmatprep.subr.bf16.mxu0 0
        %311 = vmatpush1.bf16.msra.mxu0 0
        %312 = vmatprep.subr.bf16.mxu0 0
        %313 = vmatpush1.bf16.msra.mxu0 0
        %314 = vmatprep.subr.bf16.mxu0 0
        %315 = vmatpush1.bf16.msra.mxu0 0
        %316 = vmatprep.subr.bf16.mxu0 0
        %317 = vmatpush1.bf16.msra.mxu0 0
        %318 = vmatprep.subr.bf16.mxu0 0
        %319 = vmatpush1.bf16.msra.mxu0 0
        %320 = vmatprep.subr.bf16.mxu0 0
        %321 = vmatpush1.bf16.msra.mxu0 0
        %322 = vmatprep.subr.bf16.mxu0 0
        %323 = vmatpush1.bf16.msra.mxu0 0
        %324 = vmatprep.subr.bf16.mxu0 0
        %325 = vmatpush1.bf16.msra.mxu0 0
        %326 = vmatprep.subr.bf16.mxu0 0
        %327 = vmatpush1.bf16.msra.mxu0 0
        %328 = vmatprep.subr.bf16.mxu0 0
        %329 = vmatpush1.bf16.msra.mxu0 0
        %330 = vmatprep.subr.bf16.mxu0 0
        %331 = vmatpush1.bf16.msra.mxu0 0
        %332 = vmatprep.mubr.bf16.mxu0 0
        %333 = vmatmul.mubr.bf16.gmra.mrb[0].mxu0 %v298
        %v334 = vpop.f32.mrb[0].mxu0
        %v335 = vadd.f32 %v282, %v334
        %v336 = vpop.f32.mrb[0].mxu0
        %v337 = vpop.f32.mrb[0].mxu0
        %v338 = vpop.f32.mrb[0].mxu0
        %339 = vdwg.mxu0
        %v340 = vpack.c.bf16 %v335, %v335
        %vm341 = vcmask 257024
        %342 = vst.msk [vmem:[%s262] sm:$0xf] %vm341, %v340
        %v344 = vunpack.c.l.b16 %v340
        %v345 = vpack.c.b16 %v344, %v344
        %346 = vrot.lane.b32.xlu0 %v345, 96
        %v347 = vpop.permute.xlu0 %346
        %349 = vst.msk [vmem:[%s269] sm:$0xf] %vm341, %v347
        %s350 = sand.u32 %s118, 1
        %s351 = scalar_lea.sflag [#allocation4], %s350
        %s352 = sand.u32 %s118, 1
        %s353 = smul.addr %s352, 4
        %s354 = scalar_lea.vmem [#allocation8], %s353
        %s355 = sand.u32 %s146, 1
        %s356 = scalar_lea.sflag [#allocation10], %s355
        %s357 = sand.u32 %s146, 1
        %s358 = smul.addr %s357, 4
        %s359 = scalar_lea.vmem [#allocation9], %s358
        // Predicated region
        $region45: #{tpu_custom_call.1} parent=31 // pred_check
          %p360 = pneg %p128
        $region46: #{tpu_custom_call.1} parent=31 // pred_check_branch
          %362 = sbr.rel (%p360) target = $region48
        $region47: #{tpu_custom_call.1} parent=31 // pred_region
          %s364 = ssub.s32 64, 64
          %365 = vsyncadd %s351, %s364
          %s366 = sadd.s32 %s31, %s30
          %s367 = smul.addr %s366, 64
          %s368 = scalar_lea.hbm %s3, %s367
          %s370 = sshll.u32 %s354, 4
          %s371 = int_to_ptr.vmem [resolvable:$true] %s370
          %373 = dma.vmem_to_hbm [thread:$0]  %s371, 64, %s368, %s351
        $region48: #{tpu_custom_call.1} parent=31 // pred_fallthru
          _
        // Predicated region
        $region49: #{tpu_custom_call.1} parent=31 // pred_check
          %p374 = pneg %p156
        $region50: #{tpu_custom_call.1} parent=31 // pred_check_branch
          %376 = sbr.rel (%p374) target = $region52
        $region51: #{tpu_custom_call.1} parent=31 // pred_region
          %s378 = ssub.s32 64, 64
          %379 = vsyncadd %s356, %s378
          %s380 = sadd.s32 %s31, %s30
          %s381 = smul.addr %s380, 64
          %s382 = scalar_lea.hbm %s4, %s381
          %s384 = sshll.u32 %s359, 4
          %s385 = int_to_ptr.vmem [resolvable:$true] %s384
          %387 = dma.vmem_to_hbm [thread:$0]  %s385, 64, %s382, %s356
        $region52: #{tpu_custom_call.1} parent=31 // pred_fallthru
          _
      $region32: #{tpu_custom_call.1} parent=5 // pred_fallthru
        _
      %p388 = scmp.le.s32.totalorder 2, %s21
      // Predicated region
      $region53: #{tpu_custom_call.1} parent=5 // pred_check
        %p389 = pneg %p388
      $region54: #{tpu_custom_call.1} parent=5 // pred_check_branch
        %391 = sbr.rel (%p389) target = $region56
      $region55: #{tpu_custom_call.1} parent=5 // pred_region
        %s392 = ssub.s32 %s21, 2
        // Predicated region
        $region57: #{tpu_custom_call.1} parent=55 // pred_check
          %p393 = pneg %p134
        $region58: #{tpu_custom_call.1} parent=55 // pred_check_branch
          %395 = sbr.rel (%p393) target = $region60
        $region59: #{tpu_custom_call.1} parent=55 // pred_region
          %s396 = sand.u32 %s119, 1
          %s397 = scalar_lea.sflag [#allocation4], %s396
          %s398 = sand.u32 %s119, 1
          %s399 = smul.addr %s398, 4
          %s400 = scalar_lea.vmem [#allocation8], %s399
          %401 = dma.done %s397, 64
        $region60: #{tpu_custom_call.1} parent=55 // pred_fallthru
          _
        // Predicated region
        $region61: #{tpu_custom_call.1} parent=55 // pred_check
          %p402 = pneg %p162
        $region62: #{tpu_custom_call.1} parent=55 // pred_check_branch
          %404 = sbr.rel (%p402) target = $region64
        $region63: #{tpu_custom_call.1} parent=55 // pred_region
          %s405 = sand.u32 %s147, 1
          %s406 = scalar_lea.sflag [#allocation10], %s405
          %s407 = sand.u32 %s147, 1
          %s408 = smul.addr %s407, 4
          %s409 = scalar_lea.vmem [#allocation9], %s408
          %410 = dma.done %s406, 64
        $region64: #{tpu_custom_call.1} parent=55 // pred_fallthru
          _
      $region56: #{tpu_custom_call.1} parent=5 // pred_fallthru
        _
    $region6: #{tpu_custom_call.1} parent=1 // loop_footer
      %s25 = sadd.s32 1, %s21
    $region7: #{tpu_custom_call.1} parent=1 // loop_footer_branch
      %20 = sbr.rel target = $region3
    $region8: #{tpu_custom_call.1} parent=1 // loop_exit
      _
    %411 = vsyncpa [#allocation3], 1
    %s412 = scalar_lea.sflag [#allocation3], 1
    %413 = vsyncpa %s412, 1
    %414 = vsyncpa [#allocation6], 1
    %415 = vsyncpa [#allocation4], 1
    %s416 = scalar_lea.sflag [#allocation4], 1
    %417 = vsyncpa %s416, 1
    %418 = vsyncpa [#allocation10], 1
    %s419 = scalar_lea.sflag [#allocation10], 1
    %420 = vsyncpa %s419, 1

</llo_original>
